<compile_context>
chip_gen: v5e
topology: v5e:2x2
jax: 0.10.0
libtpu: 0.0.40
codegen_flags: <defaults>
</compile_context>

<pallas_src>
import jax
import jax.numpy as jnp
from jax.experimental import pallas as pl
from jax.experimental.pallas import tpu as pltpu


def _normalize_kernel(x_ref, sb_ref, o_ref):
    # (tile_n, CHW) * (1, CHW) + (1, CHW): pure VPU fused mul-add, HBM-bound.
    x = x_ref[...].astype(jnp.float32)
    y = x * sb_ref[0:1, :] + sb_ref[1:2, :]
    o_ref[...] = y.astype(o_ref.dtype)


def _sublane_multiple(itemsize):
    # Sub-32-bit dtypes pack along sublanes: f32 -> 8, bf16 -> 16, int8/u8 -> 32.
    return max(8, 32 // int(itemsize))


def _pick_row_tile(n_rows, row_elems, in_itemsize, out_itemsize, target_bytes=4 << 20):
    """Row tile: ~target_bytes of input/step, (8,128)-legal, >=4 (even) grid steps."""
    m = max(_sublane_multiple(in_itemsize), _sublane_multiple(out_itemsize))
    if n_rows <= m:
        return n_rows                         # block dim == full array dim is legal
    rows = max(m, (target_bytes // (row_elems * in_itemsize)) // m * m)
    # Guarantee >= ~4 pipeline steps so writeback(i-1) overlaps prefetch(i+1).
    quarter = (n_rows // 4) // m * m
    if quarter >= m:
        rows = min(rows, quarter)
    rows = min(rows, n_rows)
    # Prefer an even step count: the parallel axis shards across v7x's 2 TCs.
    for _ in range(64):
        if rows <= m or pl.cdiv(n_rows, rows) % 2 == 0:
            break
        rows -= m
    return rows


def normalize(x, mean, std, out_dtype=None):
    """x: (N, C, H, W); mean/std: (C,) -> (N, C, H, W) in out_dtype (default x.dtype).

    TODO(synk): for end-to-end pipelines, feed uint8 input and/or pass
    out_dtype=jnp.bfloat16 here to cut HBM bytes (up to ~2.5-2.7x on this
    purely memory-bound op); default keeps the module's f32->f32 semantics.
    """
    n, c, h, w = x.shape
    chw = c * h * w
    out_dtype = jnp.dtype(out_dtype) if out_dtype is not None else x.dtype

    # Fold (x - mean)/std into x*scale + bias; expand per-channel stats to one
    # lane-dense (2, C*H*W) operand (row 0 = scale, row 1 = bias). NCHW layout.
    inv_std = 1.0 / std.astype(jnp.float32)
    scale_row = jnp.repeat(inv_std, h * w)
    bias_row = jnp.repeat(-mean.astype(jnp.float32) * inv_std, h * w)
    sb = jnp.stack([scale_row, bias_row]).reshape(2, chw)

    # Lane-dense layout: last dim is C*H*W (multiple of 128 for CIFAR-style shapes)
    # -> unmasked full-width vector stores.
    x2 = x.reshape(n, chw)

    tile_n = _pick_row_tile(n, chw, x.dtype.itemsize, out_dtype.itemsize)
    grid = (pl.cdiv(n, tile_n),)

    total = n * chw
    cost = pl.CostEstimate(
        flops=2 * total,                      # one mul + one add per element
        transcendentals=0,
        bytes_accessed=total * (x.dtype.itemsize + out_dtype.itemsize) + sb.size * 4,
    )

    # Explicit VMEM budget: double-buffered x/out tiles + constants + headroom,
    # clamped to [32 MiB, 48 MiB] (safe on v5e/v6e/v7x; v7x physical is 64 MiB/TC).
    tile_bytes = tile_n * chw * (x.dtype.itemsize + out_dtype.itemsize)
    vmem_limit = int(min(max(2 * tile_bytes + 2 * sb.size * 4 + (4 << 20), 32 << 20),
                         48 << 20))

    out2 = pl.pallas_call(
        _normalize_kernel,
        out_shape=jax.ShapeDtypeStruct((n, chw), out_dtype),
        grid=grid,
        in_specs=[
            pl.BlockSpec((tile_n, chw), lambda i: (i, 0)),
            pl.BlockSpec((2, chw), lambda i: (0, 0)),     # grid-invariant: DMA'd once
        ],
        out_specs=pl.BlockSpec((tile_n, chw), lambda i: (i, 0)),
        compiler_params=pltpu.CompilerParams(
            dimension_semantics=("parallel",),            # both TCs on v7x
            vmem_limit_bytes=vmem_limit,
        ),
        cost_estimate=cost,
    )(x2, sb)

    return out2.reshape(n, c, h, w)


if __name__ == "__main__":
    key = jax.random.PRNGKey(0)

    # Deterministic CIFAR-100-style per-channel stats, set in-script.
    mean = jnp.array([0.5071, 0.4865, 0.4409], dtype=jnp.float32)
    std = jnp.array([0.2673, 0.2564, 0.2762], dtype=jnp.float32)

    # Small demo shape (module hardcodes 3 channels via reshape(1,3,1,1)).
    N, C, H, W = 2, 3, 16, 16
    x = jax.random.normal(key, (N, C, H, W), dtype=jnp.float32)
    out = jax.block_until_ready(normalize(x, mean, std))
    ref = (x - mean.reshape(1, 3, 1, 1)) / std.reshape(1, 3, 1, 1)
    assert out.shape == (N, C, H, W)
    assert jnp.allclose(out, ref, atol=1e-5, rtol=1e-5)

    # Second check exercising the pipelined multi-step (even) grid path.
    k2 = jax.random.PRNGKey(1)
    x2 = jax.random.normal(k2, (32, 3, 32, 32), dtype=jnp.float32)
    out2 = jax.block_until_ready(normalize(x2, mean, std))
    ref2 = (x2 - mean.reshape(1, 3, 1, 1)) / std.reshape(1, 3, 1, 1)
    assert jnp.allclose(out2, ref2, atol=1e-5, rtol=1e-5)

    print("KERNEL_OK")
</pallas_src>

<mosaic_0001>
module attributes {stable_mosaic.version = 11 : i64} {
  func.func @_normalize_kernel(%arg0: i32, %arg1: memref<2x768xf32, #tpu.memory_space<vmem>>, %arg2: memref<2x768xf32, #tpu.memory_space<vmem>>, %arg3: memref<2x768xf32, #tpu.memory_space<vmem>>) attributes {dimension_semantics = [#tpu.dimension_semantics<parallel>], iteration_bounds = array<i64: 1>, scalar_prefetch = 0 : i64, scratch_operands = 0 : i64, tpu.core_type = #tpu.core_type<tc>, window_params = [{transform_indices = @transform_0, window_bounds = array<i64: 2, 768>}, {pipeline_mode = #tpu.pipeline_mode<synchronous>, transform_indices = @transform_1, window_bounds = array<i64: 2, 768>}, {transform_indices = @transform_2, window_bounds = array<i64: 2, 768>}]} {
    %c0 = arith.constant 0 : index
    %c0_0 = arith.constant 0 : index
    %0 = vector.load %arg1[%c0, %c0_0] : memref<2x768xf32, #tpu.memory_space<vmem>>, vector<2x768xf32>
    %c0_1 = arith.constant 0 : index
    %c0_2 = arith.constant 0 : index
    %1 = vector.load %arg2[%c0_1, %c0_2] : memref<2x768xf32, #tpu.memory_space<vmem>>, vector<1x768xf32>
    %2 = vector.broadcast %1 : vector<1x768xf32> to vector<2x768xf32>
    %3 = arith.mulf %0, %2 : vector<2x768xf32>
    %c1 = arith.constant 1 : index
    %c0_3 = arith.constant 0 : index
    %4 = vector.load %arg2[%c1, %c0_3] : memref<2x768xf32, #tpu.memory_space<vmem>>, vector<1x768xf32>
    %5 = vector.broadcast %4 : vector<1x768xf32> to vector<2x768xf32>
    %6 = arith.addf %3, %5 : vector<2x768xf32>
    %c0_4 = arith.constant 0 : index
    %c0_5 = arith.constant 0 : index
    %7 = vector.load %arg3[%c0_4, %c0_5] : memref<2x768xf32, #tpu.memory_space<vmem>>, vector<2x768xf32>
    tpu.vector_store %arg3[%c0_4, %c0_5], %6 {strides = array<i32>} : memref<2x768xf32, #tpu.memory_space<vmem>>, vector<2x768xf32>,
    return
  }
  func.func @transform_0(%arg0: i32) -> (i32, i32) {
    %c0_i32 = arith.constant 0 : i32
    %c0_i32_0 = arith.constant 0 : i32
    return %arg0, %c0_i32 : i32, i32
  }
  func.func @transform_1(%arg0: i32) -> (i32, i32) {
    %c0_i32 = arith.constant 0 : i32
    %c0_i32_0 = arith.constant 0 : i32
    %c0_i32_1 = arith.constant 0 : i32
    return %c0_i32, %c0_i32_0 : i32, i32
  }
  func.func @transform_2(%arg0: i32) -> (i32, i32) {
    %c0_i32 = arith.constant 0 : i32
    %c0_i32_0 = arith.constant 0 : i32
    return %arg0, %c0_i32 : i32, i32
  }
}

</mosaic_0001>

<llo_original>
// kernel: tpu_custom_call.1
$region0: #{tpu_custom_call.1}
  #allocation0 [shape = 'u32[]', space=smem, size = 0x4, offset = 0x4, fixed_abs, tag = 'smem constant byte address 0x4 - core index']
  #allocation1 [shape = 'u32[72,128]{1,0:T(1,128)}', space=vmem, size = 0x9000, scoped, tag = 'internal scratch']
  %s0 = inlined_call_operand.hbm [shape: f32[2,768], index: 0, kind: input, shape index: {}]
  %s1 = inlined_call_operand.hbm [shape: f32[2,768], index: 1, kind: input, shape index: {}]
  %s2 = inlined_call_operand.hbm [shape: f32[2,768], index: 2, kind: output, shape index: {}]
  %s3 = sld [smem:[#allocation0]]
  $region26: #{tpu_custom_call.1} parent=0
    _
  %s5 = ssub.s32 1, %s3
  %s6 = scalar_select 0, %s5, %s3
  $region1: #{tpu_custom_call.1} parent=0
    #allocation2 [shape = 'u8[6144]{0}', space=vmem, size = 0x1800, scoped, tag = 'input window, operand 0, single buffered']
    #allocation3 [shape = 's32[1]{0}', space=sflag, size = 0x4, scoped, tag = 'scoped memory for tpu_custom_call.1']
    #allocation4 [shape = 's32[1]{0}', space=sflag, size = 0x4, scoped, tag = 'scoped memory for tpu_custom_call.1']
    #allocation5 [shape = 'u8[6144]{0}', space=vmem, size = 0x1800, scoped, tag = 'input window, operand 1, single buffered']
    #allocation6 [shape = 's32[1]{0}', space=sflag, size = 0x4, scoped, tag = 'scoped memory for tpu_custom_call.1']
    #allocation7 [shape = 'u8[6144]{0}', space=vmem, size = 0x1800, scoped, tag = 'output window, operand 0, single buffered']
    %7 = vsyncpa [#allocation3], 0
    %8 = vsyncpa [#allocation6], 0
    %9 = vsyncpa [#allocation4], 0
    // Predicated region
    $region2: #{tpu_custom_call.1} parent=1 // pred_check
      _
    $region3: #{tpu_custom_call.1} parent=1 // pred_check_branch
      %11 = sbr.rel (0) target = $region5
    $region4: #{tpu_custom_call.1} parent=1 // pred_region
      %13 = vsyncadd [#allocation3], 0
      %s15 = sshll.u32 %s0, 4
      %s16 = int_to_ptr.hbm [resolvable:$true] %s15
      %s17 = sshll.u32 [#allocation2], 4
      %s18 = int_to_ptr.vmem [resolvable:$true] %s17
      %20 = dma.hbm_to_vmem [thread:$0]  %s16, 192, %s18, [#allocation3]
    $region5: #{tpu_custom_call.1} parent=1 // pred_fallthru
      _
    // Predicated region
    $region6: #{tpu_custom_call.1} parent=1 // pred_check
      _
    $region7: #{tpu_custom_call.1} parent=1 // pred_check_branch
      %22 = sbr.rel (0) target = $region9
    $region8: #{tpu_custom_call.1} parent=1 // pred_region
      %24 = vsyncadd [#allocation6], 0
      %s26 = sshll.u32 %s1, 4
      %s27 = int_to_ptr.hbm [resolvable:$true] %s26
      %s28 = sshll.u32 [#allocation5], 4
      %s29 = int_to_ptr.vmem [resolvable:$true] %s28
      %31 = dma.hbm_to_vmem [thread:$0]  %s27, 192, %s29, [#allocation6]
    $region9: #{tpu_custom_call.1} parent=1 // pred_fallthru
      _
    // Predicated region
    $region10: #{tpu_custom_call.1} parent=1 // pred_check
      _
    $region11: #{tpu_custom_call.1} parent=1 // pred_check_branch
      %33 = sbr.rel (0) target = $region13
    $region12: #{tpu_custom_call.1} parent=1 // pred_region
      %35 = dma.done [#allocation3], 192
    $region13: #{tpu_custom_call.1} parent=1 // pred_fallthru
      _
    // Predicated region
    $region14: #{tpu_custom_call.1} parent=1 // pred_check
      _
    $region15: #{tpu_custom_call.1} parent=1 // pred_check_branch
      %37 = sbr.rel (0) target = $region17
    $region16: #{tpu_custom_call.1} parent=1 // pred_region
      %39 = dma.done [#allocation6], 192
    $region17: #{tpu_custom_call.1} parent=1 // pred_fallthru
      _
    %v40 = vld [vmem:[#allocation2] sm:$0xff]
    %v41 = vld [vmem:[#allocation2 + $0x8] sm:$0xf]
    %v42 = vld [vmem:[#allocation5] ss:$2 sm:$0x3f]
    %v44 = vperm.slane %v42, 0
    %v45 = vperm.slane %v42, 1
    %v46 = vperm.slane %v42, 2
    %v47 = vperm.slane %v42, 3
    %v48 = vperm.slane %v42, 4
    %v49 = vperm.slane %v42, 5
    %v50 = vrot.slane %v45, 6
    %v51 = vrot.slane %v46, 4
    %v52 = vrot.slane %v47, 2
    %v53 = vrot.slane %v49, 6
    %vm54 = vcmask 1041408
    %v55 = vsel %vm54, %v44, %v50
    %vm56 = vcmask 1045508
    %v57 = vsel %vm56, %v51, %v52
    %vm58 = vcmask 1043456
    %v59 = vsel %vm58, %v55, %v57
    %v60 = vsel %vm54, %v48, %v53
    %v63 = vmul.f32 %v40, %v59
    %v64 = vmul.f32 %v41, %v60
    %s65 = scalar_lea.vmem [#allocation5], 1
    %v66 = vld [vmem:[%s65] ss:$2 sm:$0x3f]
    %v68 = vperm.slane %v66, 0
    %v69 = vperm.slane %v66, 1
    %v70 = vperm.slane %v66, 2
    %v71 = vperm.slane %v66, 3
    %v72 = vperm.slane %v66, 4
    %v73 = vperm.slane %v66, 5
    %v74 = vrot.slane %v69, 6
    %v75 = vrot.slane %v70, 4
    %v76 = vrot.slane %v71, 2
    %v77 = vrot.slane %v73, 6
    %v78 = vsel %vm54, %v68, %v74
    %v79 = vsel %vm56, %v75, %v76
    %v80 = vsel %vm58, %v78, %v79
    %v81 = vsel %vm54, %v72, %v77
    %v84 = vadd.f32 %v63, %v80
    %v85 = vadd.f32 %v64, %v81
    %86 = vst [vmem:[#allocation7] sm:$0xff] %v84
    %87 = vst [vmem:[#allocation7 + $0x8] sm:$0xf] %v85
    // Predicated region
    $region18: #{tpu_custom_call.1} parent=1 // pred_check
      _
    $region19: #{tpu_custom_call.1} parent=1 // pred_check_branch
      %89 = sbr.rel (0) target = $region21
    $region20: #{tpu_custom_call.1} parent=1 // pred_region
      %91 = vsyncadd [#allocation4], 0
      %s93 = sshll.u32 [#allocation7], 4
      %s94 = int_to_ptr.vmem [resolvable:$true] %s93
      %s95 = sshll.u32 %s2, 4
      %s96 = int_to_ptr.hbm [resolvable:$true] %s95
      %98 = dma.vmem_to_hbm [thread:$0]  %s94, 192, %s96, [#allocation4]
    $region21: #{tpu_custom_call.1} parent=1 // pred_fallthru
      _
    // Predicated region
    $region22: #{tpu_custom_call.1} parent=1 // pred_check
      _
    $region23: #{tpu_custom_call.1} parent=1 // pred_check_branch
      %100 = sbr.rel (0) target = $region25
    $region24: #{tpu_custom_call.1} parent=1 // pred_region
      %102 = dma.done [#allocation4], 192
    $region25: #{tpu_custom_call.1} parent=1 // pred_fallthru
      _
    %103 = vsyncpa [#allocation3], 1
    %104 = vsyncpa [#allocation6], 1
    %105 = vsyncpa [#allocation4], 1

</llo_original>
